<compile_context>
chip_gen: v5e
topology: v5e:2x2
jax: 0.10.0
libtpu: 0.0.40
codegen_flags: <defaults>
</compile_context>

<pallas_src>
import jax
import jax.numpy as jnp
from jax.experimental import pallas as pl
from jax.experimental.pallas import tpu as pltpu


def _fused_kernel(x_ref, w1bd_ref, b1_ref, wch_ref, b2_ref, wf_ref, bf_ref, o_ref):
    """Fused forward of seperate_FC_filter_first_v2 on one row tile.

    x_ref   : (tile_n, C*F) VMEM  row-major flattened input rows x[n].reshape(C*F)
    w1bd_ref: (C*F, C*F)    VMEM  kron(I_C, fc_filter_1.weight.T)   (block-diagonal)
    b1_ref  : (1, C*F)      VMEM  fc_filter_1.bias tiled C times
    wch_ref : (C*F, C*F)    VMEM  kron(fc_channel_1.weight.T, I_F)  (channel mix)
    b2_ref  : (1, C*F)      VMEM  fc_channel_1.bias repeated F times
    wf_ref  : (C*F, F)      VMEM  fused fc_filter_2 x fc_channel_2 weight
    bf_ref  : (1, F)        VMEM  fused bias (b3 folded through fc_channel_2, + b4)
    o_ref   : (tile_n, F)   VMEM  output
    """
    # fc_filter_1 + ReLU: one lane-dense MXU matmul (block-diag weight).
    g1 = jnp.dot(x_ref[...], w1bd_ref[...], preferred_element_type=jnp.float32)
    g1 = jnp.maximum(g1 + b1_ref[...], 0.0)                        # (tile_n, C*F)

    # permute -> fc_channel_1 -> ReLU -> permute back: one MXU matmul
    # (kron(w2^T, I_F) realizes the channel mix on the flattened layout).
    g2 = jnp.dot(g1, wch_ref[...], preferred_element_type=jnp.float32)
    g2 = jnp.maximum(g2 + b2_ref[...], 0.0)                        # (tile_n, C*F)

    # fc_filter_2 (no ReLU) fused with fc_channel_2 + ReLU: final matmul, no scratch.
    out = jnp.dot(g2, wf_ref[...], preferred_element_type=jnp.float32) + bf_ref[...]
    o_ref[...] = jnp.maximum(out, 0.0).astype(o_ref.dtype)


def pack_params(w1, b1, w2, b2, w3, b3, w4, b4):
    """Trace-time parameter packing. Call ONCE and reuse across forwards
    (hoisted out of the per-call jit path as recommended)."""
    F = w1.shape[0]
    C = w2.shape[0]
    eye_c = jnp.eye(C, dtype=w1.dtype)
    eye_f = jnp.eye(F, dtype=w1.dtype)

    # Block-diagonal fc_filter_1:  w1bd[c*F+f, c'*F+f'] = delta(c,c') * w1[f', f]
    w1bd = jnp.kron(eye_c, w1.T)                                    # (C*F, C*F)
    b1t = jnp.tile(b1, (C,)).reshape(1, C * F)                      # b1t[c*F+f] = b1[f]

    # Channel mix:  wch[c*F+f, c'*F+f'] = w2[c', c] * delta(f, f')
    wch = jnp.kron(w2.T, eye_f)                                     # (C*F, C*F)
    b2t = jnp.repeat(b2, F).reshape(1, C * F)                       # b2t[c*F+f] = b2[c]

    # Fuse fc_filter_2 (F->1, no ReLU) with fc_channel_2 (C->F):
    #   out[n,f'] = sum_{c,f} g2[n,c*F+f] * w3[0,f] * w4[f',c]
    #               + b3[0] * sum_c w4[f',c] + b4[f']
    wf = (w4.T[:, None, :] * w3[0][None, :, None]).reshape(C * F, F)  # (C*F, F)
    bf = (b3[0] * jnp.sum(w4, axis=1) + b4).reshape(1, F)             # (1, F)

    return w1bd, b1t, wch, b2t, wf, bf


def _pick_tile_n(n):
    for cand in (512, 256, 128, 64, 32, 16, 8):
        if n % cand == 0:
            return cand
    return n  # fall back to a single full-extent tile (legal: equals full dim)


@jax.jit
def seperate_fc_filter_first_v2(x, w1bd, b1t, wch, b2t, wf, bf):
    """x: (B, T, C, F) -> (B, T, F), using the packed parameters from pack_params."""
    B, T, C, F = x.shape
    N = B * T
    CF = C * F

    # Free, contiguous reshape (b,t,c,f is already row-major) — no transpose pass.
    x2d = x.reshape(N, CF)

    tile_n = _pick_tile_n(N)
    grid = (N // tile_n,) if N % tile_n == 0 else (1,)

    out2d = pl.pallas_call(
        _fused_kernel,
        out_shape=jax.ShapeDtypeStruct((N, F), x.dtype),
        grid=grid,
        in_specs=[
            pl.BlockSpec((tile_n, CF), lambda i: (i, 0)),   # x rows (pipelined)
            pl.BlockSpec((CF, CF), lambda i: (0, 0)),       # block-diag w1^T (resident)
            pl.BlockSpec((1, CF), lambda i: (0, 0)),        # tiled b1
            pl.BlockSpec((CF, CF), lambda i: (0, 0)),       # channel-mix weight
            pl.BlockSpec((1, CF), lambda i: (0, 0)),        # repeated b2
            pl.BlockSpec((CF, F), lambda i: (0, 0)),        # fused tail weight
            pl.BlockSpec((1, F), lambda i: (0, 0)),         # fused tail bias
        ],
        out_specs=pl.BlockSpec((tile_n, F), lambda i: (i, 0)),
        compiler_params=pltpu.CompilerParams(
            dimension_semantics=("parallel",)),
    )(x2d, w1bd, b1t, wch, b2t, wf, bf)

    return out2d.reshape(B, T, F)


def reference_forward(x, w1, b1, w2, b2, w3, b3, w4, b4):
    """Pure-JAX op-by-op mirror of the PyTorch module (for correctness check)."""
    y = jax.nn.relu(jnp.einsum('btcf,gf->btcg', x, w1) + b1)
    y = jnp.transpose(y, (0, 1, 3, 2))
    y = jax.nn.relu(jnp.einsum('btfc,kc->btfk', y, w2) + b2)
    y = jnp.transpose(y, (0, 1, 3, 2))
    y = jnp.einsum('btcf,of->btco', y, w3) + b3          # (B,T,C,1), no ReLU
    y = y[..., 0]                                        # squeeze(3)
    y = jax.nn.relu(jnp.einsum('btc,fc->btf', y, w4) + b4)
    return y


if __name__ == "__main__":
    sensor_channel = 4      # C
    filter_num = 32         # F  (C*F = 128 -> lane-dense operands)
    B, T = 2, 8             # N = B*T = 16

    key = jax.random.PRNGKey(0)
    keys = jax.random.split(key, 9)

    def init_linear(kw, kb, out_f, in_f):
        bound = 1.0 / (in_f ** 0.5)     # PyTorch nn.Linear default init range
        W = jax.random.uniform(kw, (out_f, in_f), jnp.float32, -bound, bound)
        b = jax.random.uniform(kb, (out_f,), jnp.float32, -bound, bound)
        return W, b

    w1, b1 = init_linear(keys[0], keys[1], filter_num, filter_num)          # fc_filter_1
    w2, b2 = init_linear(keys[2], keys[3], sensor_channel, sensor_channel)  # fc_channel_1
    w3, b3 = init_linear(keys[4], keys[5], 1, filter_num)                   # fc_filter_2
    w4, b4 = init_linear(keys[6], keys[7], filter_num, sensor_channel)      # fc_channel_2

    x = jax.random.normal(keys[8], (B, T, sensor_channel, filter_num), jnp.float32)

    # Pack once (hoisted out of the per-forward path), reuse across calls.
    packed = pack_params(w1, b1, w2, b2, w3, b3, w4, b4)
    packed = jax.tree_util.tree_map(jax.block_until_ready, packed)

    out = seperate_fc_filter_first_v2(x, *packed)
    out = jax.block_until_ready(out)

    ref = reference_forward(x, w1, b1, w2, b2, w3, b3, w4, b4)
    assert out.shape == (B, T, filter_num)
    assert jnp.allclose(out, ref, atol=1e-5, rtol=1e-5), "mismatch vs reference"

    print("KERNEL_OK")
</pallas_src>

<mosaic_0001>
module attributes {stable_mosaic.version = 11 : i64} {
  func.func @_fused_kernel(%arg0: i32, %arg1: memref<16x128xf32, #tpu.memory_space<vmem>>, %arg2: memref<128x128xf32, #tpu.memory_space<vmem>>, %arg3: memref<1x128xf32, #tpu.memory_space<vmem>>, %arg4: memref<128x128xf32, #tpu.memory_space<vmem>>, %arg5: memref<1x128xf32, #tpu.memory_space<vmem>>, %arg6: memref<128x32xf32, #tpu.memory_space<vmem>>, %arg7: memref<1x32xf32, #tpu.memory_space<vmem>>, %arg8: memref<16x32xf32, #tpu.memory_space<vmem>>) attributes {dimension_semantics = [#tpu.dimension_semantics<parallel>], iteration_bounds = array<i64: 1>, scalar_prefetch = 0 : i64, scratch_operands = 0 : i64, tpu.core_type = #tpu.core_type<tc>, window_params = [{transform_indices = @transform_0, window_bounds = array<i64: 16, 128>}, {pipeline_mode = #tpu.pipeline_mode<synchronous>, transform_indices = @transform_1, window_bounds = array<i64: 128, 128>}, {pipeline_mode = #tpu.pipeline_mode<synchronous>, transform_indices = @transform_2, window_bounds = array<i64: 1, 128>}, {pipeline_mode = #tpu.pipeline_mode<synchronous>, transform_indices = @transform_3, window_bounds = array<i64: 128, 128>}, {pipeline_mode = #tpu.pipeline_mode<synchronous>, transform_indices = @transform_4, window_bounds = array<i64: 1, 128>}, {pipeline_mode = #tpu.pipeline_mode<synchronous>, transform_indices = @transform_5, window_bounds = array<i64: 128, 32>}, {pipeline_mode = #tpu.pipeline_mode<synchronous>, transform_indices = @transform_6, window_bounds = array<i64: 1, 32>}, {transform_indices = @transform_7, window_bounds = array<i64: 16, 32>}]} {
    %c0 = arith.constant 0 : index
    %c0_0 = arith.constant 0 : index
    %0 = vector.load %arg1[%c0, %c0_0] : memref<16x128xf32, #tpu.memory_space<vmem>>, vector<16x128xf32>
    %c0_1 = arith.constant 0 : index
    %c0_2 = arith.constant 0 : index
    %1 = vector.load %arg2[%c0_1, %c0_2] : memref<128x128xf32, #tpu.memory_space<vmem>>, vector<128x128xf32>
    %cst = arith.constant dense<0.000000e+00> : vector<16x128xf32>
    %2 = tpu.matmul %0, %1, %cst {dimension_numbers = #tpu.dot_dimension_numbers<[1], [0], [0], [1], [0, 0, 1, 1], [], []>} : vector<16x128xf32>, vector<128x128xf32>, vector<16x128xf32> -> vector<16x128xf32>
    %c0_3 = arith.constant 0 : index
    %c0_4 = arith.constant 0 : index
    %3 = vector.load %arg3[%c0_3, %c0_4] : memref<1x128xf32, #tpu.memory_space<vmem>>, vector<1x128xf32>
    %4 = vector.broadcast %3 : vector<1x128xf32> to vector<16x128xf32>
    %5 = arith.addf %2, %4 : vector<16x128xf32>
    %cst_5 = arith.constant 0.000000e+00 : f32
    %6 = vector.broadcast %cst_5 : f32 to vector<16x128xf32>
    %7 = arith.maximumf %5, %6 : vector<16x128xf32>
    %c0_6 = arith.constant 0 : index
    %c0_7 = arith.constant 0 : index
    %8 = vector.load %arg4[%c0_6, %c0_7] : memref<128x128xf32, #tpu.memory_space<vmem>>, vector<128x128xf32>
    %cst_8 = arith.constant dense<0.000000e+00> : vector<16x128xf32>
    %9 = tpu.matmul %7, %8, %cst_8 {dimension_numbers = #tpu.dot_dimension_numbers<[1], [0], [0], [1], [0, 0, 1, 1], [], []>} : vector<16x128xf32>, vector<128x128xf32>, vector<16x128xf32> -> vector<16x128xf32>
    %c0_9 = arith.constant 0 : index
    %c0_10 = arith.constant 0 : index
    %10 = vector.load %arg5[%c0_9, %c0_10] : memref<1x128xf32, #tpu.memory_space<vmem>>, vector<1x128xf32>
    %11 = vector.broadcast %10 : vector<1x128xf32> to vector<16x128xf32>
    %12 = arith.addf %9, %11 : vector<16x128xf32>
    %cst_11 = arith.constant 0.000000e+00 : f32
    %13 = vector.broadcast %cst_11 : f32 to vector<16x128xf32>
    %14 = arith.maximumf %12, %13 : vector<16x128xf32>
    %c0_12 = arith.constant 0 : index
    %c0_13 = arith.constant 0 : index
    %15 = vector.load %arg6[%c0_12, %c0_13] : memref<128x32xf32, #tpu.memory_space<vmem>>, vector<128x32xf32>
    %cst_14 = arith.constant dense<0.000000e+00> : vector<16x32xf32>
    %16 = tpu.matmul %14, %15, %cst_14 {dimension_numbers = #tpu.dot_dimension_numbers<[1], [0], [0], [1], [0, 0, 1, 1], [], []>} : vector<16x128xf32>, vector<128x32xf32>, vector<16x32xf32> -> vector<16x32xf32>
    %c0_15 = arith.constant 0 : index
    %c0_16 = arith.constant 0 : index
    %17 = vector.load %arg7[%c0_15, %c0_16] : memref<1x32xf32, #tpu.memory_space<vmem>>, vector<1x32xf32>
    %18 = vector.broadcast %17 : vector<1x32xf32> to vector<16x32xf32>
    %19 = arith.addf %16, %18 : vector<16x32xf32>
    %cst_17 = arith.constant 0.000000e+00 : f32
    %20 = vector.broadcast %cst_17 : f32 to vector<16x32xf32>
    %21 = arith.maximumf %19, %20 : vector<16x32xf32>
    %c0_18 = arith.constant 0 : index
    %c0_19 = arith.constant 0 : index
    %22 = vector.load %arg8[%c0_18, %c0_19] : memref<16x32xf32, #tpu.memory_space<vmem>>, vector<16x32xf32>
    tpu.vector_store %arg8[%c0_18, %c0_19], %21 {strides = array<i32>} : memref<16x32xf32, #tpu.memory_space<vmem>>, vector<16x32xf32>,
    return
  }
  func.func @transform_0(%arg0: i32) -> (i32, i32) {
    %c0_i32 = arith.constant 0 : i32
    %c0_i32_0 = arith.constant 0 : i32
    return %arg0, %c0_i32 : i32, i32
  }
  func.func @transform_1(%arg0: i32) -> (i32, i32) {
    %c0_i32 = arith.constant 0 : i32
    %c0_i32_0 = arith.constant 0 : i32
    %c0_i32_1 = arith.constant 0 : i32
    return %c0_i32, %c0_i32_0 : i32, i32
  }
  func.func @transform_2(%arg0: i32) -> (i32, i32) {
    %c0_i32 = arith.constant 0 : i32
    %c0_i32_0 = arith.constant 0 : i32
    %c0_i32_1 = arith.constant 0 : i32
    return %c0_i32, %c0_i32_0 : i32, i32
  }
  func.func @transform_3(%arg0: i32) -> (i32, i32) {
    %c0_i32 = arith.constant 0 : i32
    %c0_i32_0 = arith.constant 0 : i32
    %c0_i32_1 = arith.constant 0 : i32
    return %c0_i32, %c0_i32_0 : i32, i32
  }
  func.func @transform_4(%arg0: i32) -> (i32, i32) {
    %c0_i32 = arith.constant 0 : i32
    %c0_i32_0 = arith.constant 0 : i32
    %c0_i32_1 = arith.constant 0 : i32
    return %c0_i32, %c0_i32_0 : i32, i32
  }
  func.func @transform_5(%arg0: i32) -> (i32, i32) {
    %c0_i32 = arith.constant 0 : i32
    %c0_i32_0 = arith.constant 0 : i32
    %c0_i32_1 = arith.constant 0 : i32
    return %c0_i32, %c0_i32_0 : i32, i32
  }
  func.func @transform_6(%arg0: i32) -> (i32, i32) {
    %c0_i32 = arith.constant 0 : i32
    %c0_i32_0 = arith.constant 0 : i32
    %c0_i32_1 = arith.constant 0 : i32
    return %c0_i32, %c0_i32_0 : i32, i32
  }
  func.func @transform_7(%arg0: i32) -> (i32, i32) {
    %c0_i32 = arith.constant 0 : i32
    %c0_i32_0 = arith.constant 0 : i32
    return %arg0, %c0_i32 : i32, i32
  }
}

</mosaic_0001>

<llo_original>
// kernel: seperate_fc_filter_first_v2.1
$region0: #{seperate_fc_filter_first_v2.1}
  #allocation0 [shape = 'u32[]', space=smem, size = 0x4, offset = 0x4, fixed_abs, tag = 'smem constant byte address 0x4 - core index']
  #allocation1 [shape = 'u32[72,128]{1,0:T(1,128)}', space=vmem, size = 0x9000, scoped, tag = 'internal scratch']
  %s0 = inlined_call_operand.vmem [shape: f32[16,128], index: 0, kind: input, shape index: {}]
  %s1 = inlined_call_operand.vmem [shape: f32[128,128], index: 1, kind: input, shape index: {}]
  %s2 = inlined_call_operand.vmem [shape: f32[1,128], index: 2, kind: input, shape index: {}]
  %s3 = inlined_call_operand.hbm [shape: f32[128,128], index: 3, kind: input, shape index: {}]
  %s4 = inlined_call_operand.vmem [shape: f32[1,128], index: 4, kind: input, shape index: {}]
  %s5 = inlined_call_operand.vmem [shape: f32[128,32], index: 5, kind: input, shape index: {}]
  %s6 = inlined_call_operand.vmem [shape: f32[1,32], index: 6, kind: input, shape index: {}]
  %s7 = inlined_call_operand.hbm [shape: f32[16,32], index: 7, kind: output, shape index: {}]
  %s8 = sld [smem:[#allocation0]]
  $region42: #{seperate_fc_filter_first_v2.1} parent=0
    _
  %s10 = ssub.s32 1, %s8
  %s11 = scalar_select 0, %s10, %s8
  $region1: #{seperate_fc_filter_first_v2.1} parent=0
    #allocation2 [shape = 'u8[65536]{0}', space=vmem, size = 0x10000, scoped, tag = 'input window, operand 3, single buffered']
    #allocation3 [shape = 's32[1]{0}', space=sflag, size = 0x4, scoped, tag = 'scoped memory for seperate_fc_filter_first_v2.1']
    #allocation4 [shape = 's32[1]{0}', space=sflag, size = 0x4, scoped, tag = 'scoped memory for seperate_fc_filter_first_v2.1']
    #allocation5 [shape = 'u8[8192]{0}', space=vmem, size = 0x2000, scoped, tag = 'output window, operand 0, single buffered']
    %12 = vsyncpa [#allocation3], 0
    %13 = vsyncpa [#allocation4], 0
    // Predicated region
    $region2: #{seperate_fc_filter_first_v2.1} parent=1 // pred_check
      _
    $region3: #{seperate_fc_filter_first_v2.1} parent=1 // pred_check_branch
      %15 = sbr.rel (0) target = $region5
    $region4: #{seperate_fc_filter_first_v2.1} parent=1 // pred_region
      _
    $region5: #{seperate_fc_filter_first_v2.1} parent=1 // pred_fallthru
      _
    // Predicated region
    $region6: #{seperate_fc_filter_first_v2.1} parent=1 // pred_check
      _
    $region7: #{seperate_fc_filter_first_v2.1} parent=1 // pred_check_branch
      %17 = sbr.rel (0) target = $region9
    $region8: #{seperate_fc_filter_first_v2.1} parent=1 // pred_region
      _
    $region9: #{seperate_fc_filter_first_v2.1} parent=1 // pred_fallthru
      _
    // Predicated region
    $region10: #{seperate_fc_filter_first_v2.1} parent=1 // pred_check
      _
    $region11: #{seperate_fc_filter_first_v2.1} parent=1 // pred_check_branch
      %19 = sbr.rel (0) target = $region13
    $region12: #{seperate_fc_filter_first_v2.1} parent=1 // pred_region
      _
    $region13: #{seperate_fc_filter_first_v2.1} parent=1 // pred_fallthru
      _
    // Predicated region
    $region14: #{seperate_fc_filter_first_v2.1} parent=1 // pred_check
      _
    $region15: #{seperate_fc_filter_first_v2.1} parent=1 // pred_check_branch
      %21 = sbr.rel (0) target = $region17
    $region16: #{seperate_fc_filter_first_v2.1} parent=1 // pred_region
      %23 = vsyncadd [#allocation3], 0
      %s24 = sshll.u32 %s3, 4
      %s25 = int_to_ptr.hbm [resolvable:$true] %s24
      %s26 = sshll.u32 [#allocation2], 4
      %s27 = int_to_ptr.vmem [resolvable:$true] %s26
      %32 = dma.hbm_to_vmem [thread:$0]  %s25, 2048, %s27, [#allocation3], 128, 128, 8
    $region17: #{seperate_fc_filter_first_v2.1} parent=1 // pred_fallthru
      _
    // Predicated region
    $region18: #{seperate_fc_filter_first_v2.1} parent=1 // pred_check
      _
    $region19: #{seperate_fc_filter_first_v2.1} parent=1 // pred_check_branch
      %34 = sbr.rel (0) target = $region21
    $region20: #{seperate_fc_filter_first_v2.1} parent=1 // pred_region
      _
    $region21: #{seperate_fc_filter_first_v2.1} parent=1 // pred_fallthru
      _
    // Predicated region
    $region22: #{seperate_fc_filter_first_v2.1} parent=1 // pred_check
      _
    $region23: #{seperate_fc_filter_first_v2.1} parent=1 // pred_check_branch
      %36 = sbr.rel (0) target = $region25
    $region24: #{seperate_fc_filter_first_v2.1} parent=1 // pred_region
      _
    $region25: #{seperate_fc_filter_first_v2.1} parent=1 // pred_fallthru
      _
    // Predicated region
    $region26: #{seperate_fc_filter_first_v2.1} parent=1 // pred_check
      _
    $region27: #{seperate_fc_filter_first_v2.1} parent=1 // pred_check_branch
      %38 = sbr.rel (0) target = $region29
    $region28: #{seperate_fc_filter_first_v2.1} parent=1 // pred_region
      _
    $region29: #{seperate_fc_filter_first_v2.1} parent=1 // pred_fallthru
      _
    // Predicated region
    $region30: #{seperate_fc_filter_first_v2.1} parent=1 // pred_check
      _
    $region31: #{seperate_fc_filter_first_v2.1} parent=1 // pred_check_branch
      %40 = sbr.rel (0) target = $region33
    $region32: #{seperate_fc_filter_first_v2.1} parent=1 // pred_region
      %42 = dma.done [#allocation3], 2048
    $region33: #{seperate_fc_filter_first_v2.1} parent=1 // pred_fallthru
      _
    %v43 = vld [vmem:[%s0] sm:$0xff]
    %v44 = vld [vmem:[%s0 + $0x8] sm:$0xff]
    %v45 = vld [vmem:[%s1] sm:$0xff]
    %v46 = vld [vmem:[%s1 + $0x8] sm:$0xff]
    %v47 = vld [vmem:[%s1 + $0x10] sm:$0xff]
    %v48 = vld [vmem:[%s1 + $0x18] sm:$0xff]
    %v49 = vld [vmem:[%s1 + $0x20] sm:$0xff]
    %v50 = vld [vmem:[%s1 + $0x28] sm:$0xff]
    %v51 = vld [vmem:[%s1 + $0x30] sm:$0xff]
    %v52 = vld [vmem:[%s1 + $0x38] sm:$0xff]
    %v53 = vld [vmem:[%s1 + $0x40] sm:$0xff]
    %v54 = vld [vmem:[%s1 + $0x48] sm:$0xff]
    %v55 = vld [vmem:[%s1 + $0x50] sm:$0xff]
    %v56 = vld [vmem:[%s1 + $0x58] sm:$0xff]
    %v57 = vld [vmem:[%s1 + $0x60] sm:$0xff]
    %v58 = vld [vmem:[%s1 + $0x68] sm:$0xff]
    %v59 = vld [vmem:[%s1 + $0x70] sm:$0xff]
    %v60 = vld [vmem:[%s1 + $0x78] sm:$0xff]
    %v61 = vld [vmem:[%s2] sm:$0x1]
    %v63 = vperm.slane %v61, 0
    %65 = vmatpush.msra.mxu0 %v60
    %66 = vmatpush.msra.mxu0 %v59
    %67 = vmatpush.msra.mxu0 %v58
    %68 = vmatpush.msra.mxu0 %v57
    %69 = vmatpush.msra.mxu0 %v56
    %70 = vmatpush.msra.mxu0 %v55
    %71 = vmatpush.msra.mxu0 %v54
    %72 = vmatpush.msra.mxu0 %v53
    %73 = vmatpush.msra.mxu0 %v52
    %74 = vmatpush.msra.mxu0 %v51
    %75 = vmatpush.msra.mxu0 %v50
    %76 = vmatpush.msra.mxu0 %v49
    %77 = vmatpush.msra.mxu0 %v48
    %78 = vmatpush.msra.mxu0 %v47
    %79 = vmatpush.msra.mxu0 %v46
    %80 = vmatpush.msra.mxu0 %v45
    %81 = vmatmul.f32.gmra.mxu0 %v43
    %v82 = vpop.f32.mrf.mxu0
    %v83 = vadd.f32 %v63, %v82
    %84 = vmatmul.f32.gmra.mxu0 %v44
    %v85 = vpop.f32.mrf.mxu0
    %v86 = vadd.f32 %v63, %v85
    %87 = vdwg.mxu0
    %v88 = vmax.f32 %v83, 0.0
    %v89 = vmax.f32 %v86, 0.0
    %v90 = vld [vmem:[#allocation2] sm:$0xff]
    %v91 = vld [vmem:[#allocation2 + $0x8] sm:$0xff]
    %v92 = vld [vmem:[#allocation2 + $0x10] sm:$0xff]
    %v93 = vld [vmem:[#allocation2 + $0x18] sm:$0xff]
    %v94 = vld [vmem:[#allocation2 + $0x20] sm:$0xff]
    %v95 = vld [vmem:[#allocation2 + $0x28] sm:$0xff]
    %v96 = vld [vmem:[#allocation2 + $0x30] sm:$0xff]
    %v97 = vld [vmem:[#allocation2 + $0x38] sm:$0xff]
    %v98 = vld [vmem:[#allocation2 + $0x40] sm:$0xff]
    %v99 = vld [vmem:[#allocation2 + $0x48] sm:$0xff]
    %v100 = vld [vmem:[#allocation2 + $0x50] sm:$0xff]
    %v101 = vld [vmem:[#allocation2 + $0x58] sm:$0xff]
    %v102 = vld [vmem:[#allocation2 + $0x60] sm:$0xff]
    %v103 = vld [vmem:[#allocation2 + $0x68] sm:$0xff]
    %v104 = vld [vmem:[#allocation2 + $0x70] sm:$0xff]
    %v105 = vld [vmem:[#allocation2 + $0x78] sm:$0xff]
    %v106 = vld [vmem:[%s4] sm:$0x1]
    %v108 = vperm.slane %v106, 0
    %110 = vmatpush.msra.mxu0 %v105
    %111 = vmatpush.msra.mxu0 %v104
    %112 = vmatpush.msra.mxu0 %v103
    %113 = vmatpush.msra.mxu0 %v102
    %114 = vmatpush.msra.mxu0 %v101
    %115 = vmatpush.msra.mxu0 %v100
    %116 = vmatpush.msra.mxu0 %v99
    %117 = vmatpush.msra.mxu0 %v98
    %118 = vmatpush.msra.mxu0 %v97
    %119 = vmatpush.msra.mxu0 %v96
    %120 = vmatpush.msra.mxu0 %v95
    %121 = vmatpush.msra.mxu0 %v94
    %122 = vmatpush.msra.mxu0 %v93
    %123 = vmatpush.msra.mxu0 %v92
    %124 = vmatpush.msra.mxu0 %v91
    %125 = vmatpush.msra.mxu0 %v90
    %126 = vmatmul.f32.gmra.mxu0 %v88
    %v127 = vpop.f32.mrf.mxu0
    %v128 = vadd.f32 %v108, %v127
    %129 = vmatmul.f32.gmra.mxu0 %v89
    %v130 = vpop.f32.mrf.mxu0
    %v131 = vadd.f32 %v108, %v130
    %132 = vdwg.mxu0
    %v133 = vmax.f32 %v128, 0.0
    %v134 = vmax.f32 %v131, 0.0
    %v135 = vld [vmem:[%s5] sm:$0xff]
    %v136 = vld [vmem:[%s5 + $0x8] sm:$0xff]
    %v137 = vld [vmem:[%s5 + $0x10] sm:$0xff]
    %v138 = vld [vmem:[%s5 + $0x18] sm:$0xff]
    %v139 = vld [vmem:[%s5 + $0x20] sm:$0xff]
    %v140 = vld [vmem:[%s5 + $0x28] sm:$0xff]
    %v141 = vld [vmem:[%s5 + $0x30] sm:$0xff]
    %v142 = vld [vmem:[%s5 + $0x38] sm:$0xff]
    %v143 = vld [vmem:[%s5 + $0x40] sm:$0xff]
    %v144 = vld [vmem:[%s5 + $0x48] sm:$0xff]
    %v145 = vld [vmem:[%s5 + $0x50] sm:$0xff]
    %v146 = vld [vmem:[%s5 + $0x58] sm:$0xff]
    %v147 = vld [vmem:[%s5 + $0x60] sm:$0xff]
    %v148 = vld [vmem:[%s5 + $0x68] sm:$0xff]
    %v149 = vld [vmem:[%s5 + $0x70] sm:$0xff]
    %v150 = vld [vmem:[%s5 + $0x78] sm:$0xff]
    %v151 = vld [vmem:[%s6] sm:$0x1]
    %v153 = vperm.slane %v151, 0
    %155 = vmatpush.msra.mxu0 %v150
    %156 = vmatpush.msra.mxu0 %v149
    %157 = vmatpush.msra.mxu0 %v148
    %158 = vmatpush.msra.mxu0 %v147
    %159 = vmatpush.msra.mxu0 %v146
    %160 = vmatpush.msra.mxu0 %v145
    %161 = vmatpush.msra.mxu0 %v144
    %162 = vmatpush.msra.mxu0 %v143
    %163 = vmatpush.msra.mxu0 %v142
    %164 = vmatpush.msra.mxu0 %v141
    %165 = vmatpush.msra.mxu0 %v140
    %166 = vmatpush.msra.mxu0 %v139
    %167 = vmatpush.msra.mxu0 %v138
    %168 = vmatpush.msra.mxu0 %v137
    %169 = vmatpush.msra.mxu0 %v136
    %170 = vmatpush.msra.mxu0 %v135
    %171 = vmatmul.f32.gmra.mxu0 %v133
    %v172 = vpop.f32.mrf.mxu0
    %v173 = vadd.f32 %v153, %v172
    %174 = vmatmul.f32.gmra.mxu0 %v134
    %v175 = vpop.f32.mrf.mxu0
    %v176 = vadd.f32 %v153, %v175
    %177 = vdwg.mxu0
    %v178 = vmax.f32 %v173, 0.0
    %v179 = vmax.f32 %v176, 0.0
    %vm180 = vcmask 261120
    %181 = vst.msk [vmem:[#allocation5] sm:$0xff] %vm180, %v178
    %182 = vst.msk [vmem:[#allocation5 + $0x8] sm:$0xff] %vm180, %v179
    // Predicated region
    $region34: #{seperate_fc_filter_first_v2.1} parent=1 // pred_check
      _
    $region35: #{seperate_fc_filter_first_v2.1} parent=1 // pred_check_branch
      %184 = sbr.rel (0) target = $region37
    $region36: #{seperate_fc_filter_first_v2.1} parent=1 // pred_region
      %186 = vsyncadd [#allocation4], 0
      %s187 = sshll.u32 [#allocation5], 4
      %s188 = int_to_ptr.vmem [resolvable:$true] %s187
      %s189 = sshll.u32 %s7, 4
      %s190 = int_to_ptr.hbm [resolvable:$true] %s189
      %195 = dma.vmem_to_hbm [thread:$0]  %s188, 256, %s190, [#allocation4], 128, 128, 8
    $region37: #{seperate_fc_filter_first_v2.1} parent=1 // pred_fallthru
      _
    // Predicated region
    $region38: #{seperate_fc_filter_first_v2.1} parent=1 // pred_check
      _
    $region39: #{seperate_fc_filter_first_v2.1} parent=1 // pred_check_branch
      %197 = sbr.rel (0) target = $region41
    $region40: #{seperate_fc_filter_first_v2.1} parent=1 // pred_region
      %199 = dma.done [#allocation4], 256
    $region41: #{seperate_fc_filter_first_v2.1} parent=1 // pred_fallthru
      _
    %200 = vsyncpa [#allocation3], 1
    %201 = vsyncpa [#allocation4], 1

</llo_original>
